<compile_context>
chip_gen: v5e
topology: v5e:2x2
jax: 0.10.0
libtpu: 0.0.40
codegen_flags: <defaults>
</compile_context>

<pallas_src>
import functools

import jax
import jax.numpy as jnp
import numpy as np
from jax import lax
from jax.experimental import pallas as pl
from jax.experimental.pallas import tpu as pltpu


# ----------------------------------------------------------------------------
# Kernel A: fused projection  P = x @ W2 + b2,  W2 = [Wa - Wb | Wb]  (F, 2C)
# ----------------------------------------------------------------------------
def _proj_kernel(x_ref, w2_ref, b2_ref, p_ref):
    # x_ref: (tm, F)  w2_ref: (F, 2C)  b2_ref: (1, 2C)  p_ref: (tm, 2C)
    p_ref[...] = (jnp.dot(x_ref[...], w2_ref[...],
                          preferred_element_type=jnp.float32)
                  + b2_ref[...]).astype(p_ref.dtype)


# ----------------------------------------------------------------------------
# Kernel B: per-node neighbor max over the y-half of P + relu + residual
# ----------------------------------------------------------------------------
def _gather_max_kernel(src_ref, p_ref, x_ref, o_ref, m_ref, *, k, c, tm):
    # src_ref: (N*K,) int32 in SMEM (scalar prefetch), edges grouped by target.
    # p_ref  : (N, 2C) VMEM-resident projected table:
    #          [:, :C] = x@(Wa-Wb)+b  (z, bias folded),  [:, C:] = x@Wb  (y)
    # x_ref  : (tm, C) tile of x_last (residual path, F == C)
    # o_ref  : (tm, C) res = x + relu(z + max_j y_j)
    # m_ref  : (tm, 2C) scratch holding per-node running neighbor max
    i = pl.program_id(0)
    base = i * (tm * k)

    def body(r, carry):
        e0 = base + r * k
        acc = p_ref[pl.ds(src_ref[e0], 1), :]                  # (1, 2C)
        for kk in range(1, k):                                 # K unrolled
            acc = jnp.maximum(acc, p_ref[pl.ds(src_ref[e0 + kk], 1), :])
        m_ref[pl.ds(r, 1), :] = acc
        return carry

    lax.fori_loop(0, tm, body, 0)

    row0 = pl.multiple_of(i * tm, 8)
    p_tile = p_ref[pl.ds(row0, tm), :]                         # (tm, 2C), already in VMEM
    z = p_tile[:, :c]                                          # x_i @ (Wa-Wb) + b
    ymax = m_ref[...][:, c:]                                   # max_j x_j @ Wb
    # ReLU after the max (exact: relu is monotone), one (tm, C) pass + residual.
    o_ref[...] = (x_ref[...] + jnp.maximum(z + ymax, 0.0)).astype(o_ref.dtype)
    # TODO(synk): output is C=32 lanes (masked stores); a (tm//4, 128) lane-dense
    # repack needs an in-kernel relayout and is left out of this version.


# ----------------------------------------------------------------------------
# Wrapper
# ----------------------------------------------------------------------------
def _pick_tile(n, target):
    assert n % 8 == 0, "node count must be a multiple of 8"  # TODO(synk): pad tail tile
    t = max(8, min(target, n))
    while n % t:
        t -= 8
    # Prefer >= 2 grid steps so both TensorCores stay busy on v7x megacore.
    if n // t < 2 and t % 16 == 0 and n % (t // 2) == 0:
        t //= 2
    return t


def res_gcn_block_forward(x_seq, edge_index, W, b, *, k, tm_proj=512, tm_gather=256):
    """ResGcnBlock forward (static adj, 'edge' conv, act=relu, aggr='max').

    x_seq: (N, F, T)     edge_index: (2, N*K), grouped by target, K per node
    W: (C, 2F) weight of Linear(2F -> C), b: (C,)
    Returns (concat([x_seq, res[..., None]], axis=2), edge_index).
    """
    n_total, f, _ = x_seq.shape
    c = W.shape[0]
    assert W.shape == (c, 2 * f) and b.shape == (c,)
    assert c == f, "ResGcnBlock residual requires in_channels == out_channels"
    assert edge_index.shape == (2, n_total * k)

    x_last = x_seq[:, :, -1].astype(jnp.float32)               # (N, F) layout glue

    # Fused weight: one (F, 2C) matmul instead of two (F, C) matmuls.
    wa = W[:, :f].T                                            # acts on x_i
    wb = W[:, f:].T                                            # acts on x_j - x_i
    w2 = jnp.concatenate([wa - wb, wb], axis=1).astype(jnp.float32)        # (F, 2C)
    b2 = jnp.concatenate([b, jnp.zeros_like(b)]).reshape(1, 2 * c).astype(jnp.float32)

    tm_a = _pick_tile(n_total, tm_proj)
    tm_b = _pick_tile(n_total, tm_gather)

    # --- kernel A: P = x_last @ W2 + b2  (one MXU pass over N rows) ----------
    p = pl.pallas_call(
        _proj_kernel,
        out_shape=jax.ShapeDtypeStruct((n_total, 2 * c), jnp.float32),
        grid_spec=pltpu.PrefetchScalarGridSpec(
            num_scalar_prefetch=0,
            grid=(n_total // tm_a,),
            in_specs=[
                pl.BlockSpec((tm_a, f), lambda i: (i, 0)),
                pl.BlockSpec((f, 2 * c), lambda i: (0, 0)),
                pl.BlockSpec((1, 2 * c), lambda i: (0, 0)),
            ],
            out_specs=pl.BlockSpec((tm_a, 2 * c), lambda i: (i, 0)),
        ),
        compiler_params=pltpu.CompilerParams(
            dimension_semantics=("parallel",)),
    )(x_last, w2, b2)

    # --- kernel B: neighbor max in C-space + relu + residual -----------------
    # The projected table stays VMEM-resident; budget it against the scoped VMEM
    # limit (v7x has 64 MiB physical / 32 MiB default scoped).
    resident_bytes = n_total * 2 * c * 4
    assert resident_bytes <= 8 * 1024 * 1024, (
        "TODO(synk): switch to a manual DMA-gather (memory_space=pl.ANY) variant "
        "when the projected table does not fit comfortably in VMEM")

    src_flat = edge_index[0].astype(jnp.int32)                 # (N*K,), grouped by target

    res = pl.pallas_call(
        functools.partial(_gather_max_kernel, k=k, c=c, tm=tm_b),
        out_shape=jax.ShapeDtypeStruct((n_total, c), x_seq.dtype),
        grid_spec=pltpu.PrefetchScalarGridSpec(
            num_scalar_prefetch=1,                             # neighbor table -> SMEM
            grid=(n_total // tm_b,),
            in_specs=[
                pl.BlockSpec((n_total, 2 * c), lambda i, src: (0, 0)),  # resident P
                pl.BlockSpec((tm_b, f), lambda i, src: (i, 0)),         # x tile
            ],
            out_specs=pl.BlockSpec((tm_b, c), lambda i, src: (i, 0)),
            scratch_shapes=[pltpu.VMEM((tm_b, 2 * c), jnp.float32)],
        ),
        compiler_params=pltpu.CompilerParams(
            dimension_semantics=("parallel",)),
    )(src_flat, p, x_last)

    # History concat is pure layout; keep it in XLA glue.
    out = jnp.concatenate([x_seq, res[:, :, None].astype(x_seq.dtype)], axis=2)
    return out, edge_index


# ----------------------------------------------------------------------------
# Pure-JAX reference mirroring the PyTorch module (un-rewritten formulation)
# ----------------------------------------------------------------------------
def reference_res_gcn_block(x_seq, edge_index, W, b, *, k):
    x = x_seq[:, :, -1]
    n, f = x.shape
    src = edge_index[0].reshape(n, k)
    xi = jnp.broadcast_to(x[:, None, :], (n, k, f))
    xj = x[src]
    feat = jnp.concatenate([xi, xj - xi], axis=-1)             # (N, K, 2F)
    msg = jnp.einsum('nke,ce->nkc', feat, W) + b
    h = jnp.max(jax.nn.relu(msg), axis=1)                      # aggr='max'
    res = h + x
    return jnp.concatenate([x_seq, res[:, :, None]], axis=2)


if __name__ == "__main__":
    B, N_per, K, T = 2, 64, 8, 3
    F_in = C_out = 32                         # ResGcnBlock: channels -> channels
    N_total = B * N_per

    key = jax.random.PRNGKey(0)
    kx, kw, kb = jax.random.split(key, 3)

    # Node feature history: (BxN) x F x T
    x_seq = jax.random.normal(kx, (N_total, F_in, T), dtype=jnp.float32)

    # Deterministic Linear(2F -> C) init (PyTorch-style uniform bound).
    bound = 1.0 / np.sqrt(2 * F_in)
    W = jax.random.uniform(kw, (C_out, 2 * F_in), jnp.float32, -bound, bound)
    b = jax.random.uniform(kb, (C_out,), jnp.float32, -bound, bound)

    # Static K-regular ring graph within each batch segment, grouped by target.
    tgt_local = np.repeat(np.arange(N_per), K)
    offs = np.tile(np.arange(1, K + 1), N_per)
    src_local = (tgt_local + offs) % N_per
    src = np.concatenate([src_local + bi * N_per for bi in range(B)])
    tgt = np.concatenate([tgt_local + bi * N_per for bi in range(B)])
    edge_index = jnp.asarray(np.stack([src, tgt]), dtype=jnp.int32)   # (2, N*K)

    fwd = jax.jit(functools.partial(res_gcn_block_forward, k=K))
    out_seq, out_edge = fwd(x_seq, edge_index, W, b)
    out_seq = jax.block_until_ready(out_seq)

    ref_seq = reference_res_gcn_block(x_seq, edge_index, W, b, k=K)
    np.testing.assert_allclose(np.asarray(out_seq), np.asarray(ref_seq),
                               rtol=1e-5, atol=1e-5)
    assert out_seq.shape == (N_total, F_in, T + 1)
    assert out_seq.dtype == x_seq.dtype
    np.testing.assert_array_equal(np.asarray(out_edge), np.asarray(edge_index))
    print("KERNEL_OK")
</pallas_src>

<mosaic_0001>
module attributes {stable_mosaic.version = 11 : i64} {
  func.func @_proj_kernel(%arg0: i32, %arg1: memref<64x32xf32, #tpu.memory_space<vmem>>, %arg2: memref<32x64xf32, #tpu.memory_space<vmem>>, %arg3: memref<1x64xf32, #tpu.memory_space<vmem>>, %arg4: memref<64x64xf32, #tpu.memory_space<vmem>>) attributes {dimension_semantics = [#tpu.dimension_semantics<parallel>], iteration_bounds = array<i64: 2>, scalar_prefetch = 0 : i64, scratch_operands = 0 : i64, tpu.core_type = #tpu.core_type<tc>, window_params = [{transform_indices = @transform_0, window_bounds = array<i64: 64, 32>}, {pipeline_mode = #tpu.pipeline_mode<synchronous>, transform_indices = @transform_1, window_bounds = array<i64: 32, 64>}, {pipeline_mode = #tpu.pipeline_mode<synchronous>, transform_indices = @transform_2, window_bounds = array<i64: 1, 64>}, {transform_indices = @transform_3, window_bounds = array<i64: 64, 64>}]} {
    %c0 = arith.constant 0 : index
    %c0_0 = arith.constant 0 : index
    %0 = vector.load %arg1[%c0, %c0_0] : memref<64x32xf32, #tpu.memory_space<vmem>>, vector<64x32xf32>
    %c0_1 = arith.constant 0 : index
    %c0_2 = arith.constant 0 : index
    %1 = vector.load %arg2[%c0_1, %c0_2] : memref<32x64xf32, #tpu.memory_space<vmem>>, vector<32x64xf32>
    %cst = arith.constant dense<0.000000e+00> : vector<64x64xf32>
    %2 = tpu.matmul %0, %1, %cst {dimension_numbers = #tpu.dot_dimension_numbers<[1], [0], [0], [1], [0, 0, 1, 1], [], []>} : vector<64x32xf32>, vector<32x64xf32>, vector<64x64xf32> -> vector<64x64xf32>
    %c0_3 = arith.constant 0 : index
    %c0_4 = arith.constant 0 : index
    %3 = vector.load %arg3[%c0_3, %c0_4] : memref<1x64xf32, #tpu.memory_space<vmem>>, vector<1x64xf32>
    %4 = vector.broadcast %3 : vector<1x64xf32> to vector<64x64xf32>
    %5 = arith.addf %2, %4 : vector<64x64xf32>
    %c0_5 = arith.constant 0 : index
    %c0_6 = arith.constant 0 : index
    %6 = vector.load %arg4[%c0_5, %c0_6] : memref<64x64xf32, #tpu.memory_space<vmem>>, vector<64x64xf32>
    tpu.vector_store %arg4[%c0_5, %c0_6], %5 {strides = array<i32>} : memref<64x64xf32, #tpu.memory_space<vmem>>, vector<64x64xf32>,
    return
  }
  func.func @transform_0(%arg0: i32) -> (i32, i32) {
    %c0_i32 = arith.constant 0 : i32
    %c0_i32_0 = arith.constant 0 : i32
    return %arg0, %c0_i32 : i32, i32
  }
  func.func @transform_1(%arg0: i32) -> (i32, i32) {
    %c0_i32 = arith.constant 0 : i32
    %c0_i32_0 = arith.constant 0 : i32
    %c0_i32_1 = arith.constant 0 : i32
    return %c0_i32, %c0_i32_0 : i32, i32
  }
  func.func @transform_2(%arg0: i32) -> (i32, i32) {
    %c0_i32 = arith.constant 0 : i32
    %c0_i32_0 = arith.constant 0 : i32
    %c0_i32_1 = arith.constant 0 : i32
    return %c0_i32, %c0_i32_0 : i32, i32
  }
  func.func @transform_3(%arg0: i32) -> (i32, i32) {
    %c0_i32 = arith.constant 0 : i32
    %c0_i32_0 = arith.constant 0 : i32
    return %arg0, %c0_i32 : i32, i32
  }
}

module attributes {stable_mosaic.version = 11 : i64} {
  func.func @_gather_max_kernel(%arg0: i32, %arg1: memref<1024xi32, #tpu.memory_space<smem>>, %arg2: memref<128x64xf32, #tpu.memory_space<vmem>>, %arg3: memref<64x32xf32, #tpu.memory_space<vmem>>, %arg4: memref<64x32xf32, #tpu.memory_space<vmem>>, %arg5: memref<64x64xf32, #tpu.memory_space<vmem>>) attributes {dimension_semantics = [#tpu.dimension_semantics<parallel>], iteration_bounds = array<i64: 2>, scalar_prefetch = 1 : i64, scratch_operands = 1 : i64, tpu.core_type = #tpu.core_type<tc>, window_params = [{pipeline_mode = #tpu.pipeline_mode<synchronous>, transform_indices = @transform_0, window_bounds = array<i64: 128, 64>}, {transform_indices = @transform_1, window_bounds = array<i64: 64, 32>}, {transform_indices = @transform_2, window_bounds = array<i64: 64, 32>}]} {
    %c512_i32 = arith.constant 512 : i32
    %0 = arith.muli %arg0, %c512_i32 : i32
    %c0_i32 = arith.constant 0 : i32
    %c64_i32 = arith.constant 64 : i32
    %1 = arith.addi %c0_i32, %c64_i32 : i32
    %c1_i32 = arith.constant 1 : i32
    scf.for %arg6 = %c0_i32 to %1 step %c1_i32  : i32 {
      %c8_i32 = arith.constant 8 : i32
      %15 = arith.muli %arg6, %c8_i32 : i32
      %16 = arith.addi %0, %15 : i32
      %17 = arith.index_cast %16 : i32 to index
      %18 = memref.load %arg1[%17] : memref<1024xi32, #tpu.memory_space<smem>>
      %19 = arith.index_cast %18 : i32 to index
      %c0_8 = arith.constant 0 : index
      %20 = vector.load %arg2[%19, %c0_8] : memref<128x64xf32, #tpu.memory_space<vmem>>, vector<1x64xf32>
      %c1_i32_9 = arith.constant 1 : i32
      %21 = arith.addi %16, %c1_i32_9 : i32
      %22 = arith.index_cast %21 : i32 to index
      %23 = memref.load %arg1[%22] : memref<1024xi32, #tpu.memory_space<smem>>
      %24 = arith.index_cast %23 : i32 to index
      %c0_10 = arith.constant 0 : index
      %25 = vector.load %arg2[%24, %c0_10] : memref<128x64xf32, #tpu.memory_space<vmem>>, vector<1x64xf32>
      %26 = arith.maximumf %20, %25 : vector<1x64xf32>
      %c2_i32 = arith.constant 2 : i32
      %27 = arith.addi %16, %c2_i32 : i32
      %28 = arith.index_cast %27 : i32 to index
      %29 = memref.load %arg1[%28] : memref<1024xi32, #tpu.memory_space<smem>>
      %30 = arith.index_cast %29 : i32 to index
      %c0_11 = arith.constant 0 : index
      %31 = vector.load %arg2[%30, %c0_11] : memref<128x64xf32, #tpu.memory_space<vmem>>, vector<1x64xf32>
      %32 = arith.maximumf %26, %31 : vector<1x64xf32>
      %c3_i32 = arith.constant 3 : i32
      %33 = arith.addi %16, %c3_i32 : i32
      %34 = arith.index_cast %33 : i32 to index
      %35 = memref.load %arg1[%34] : memref<1024xi32, #tpu.memory_space<smem>>
      %36 = arith.index_cast %35 : i32 to index
      %c0_12 = arith.constant 0 : index
      %37 = vector.load %arg2[%36, %c0_12] : memref<128x64xf32, #tpu.memory_space<vmem>>, vector<1x64xf32>
      %38 = arith.maximumf %32, %37 : vector<1x64xf32>
      %c4_i32 = arith.constant 4 : i32
      %39 = arith.addi %16, %c4_i32 : i32
      %40 = arith.index_cast %39 : i32 to index
      %41 = memref.load %arg1[%40] : memref<1024xi32, #tpu.memory_space<smem>>
      %42 = arith.index_cast %41 : i32 to index
      %c0_13 = arith.constant 0 : index
      %43 = vector.load %arg2[%42, %c0_13] : memref<128x64xf32, #tpu.memory_space<vmem>>, vector<1x64xf32>
      %44 = arith.maximumf %38, %43 : vector<1x64xf32>
      %c5_i32 = arith.constant 5 : i32
      %45 = arith.addi %16, %c5_i32 : i32
      %46 = arith.index_cast %45 : i32 to index
      %47 = memref.load %arg1[%46] : memref<1024xi32, #tpu.memory_space<smem>>
      %48 = arith.index_cast %47 : i32 to index
      %c0_14 = arith.constant 0 : index
      %49 = vector.load %arg2[%48, %c0_14] : memref<128x64xf32, #tpu.memory_space<vmem>>, vector<1x64xf32>
      %50 = arith.maximumf %44, %49 : vector<1x64xf32>
      %c6_i32 = arith.constant 6 : i32
      %51 = arith.addi %16, %c6_i32 : i32
      %52 = arith.index_cast %51 : i32 to index
      %53 = memref.load %arg1[%52] : memref<1024xi32, #tpu.memory_space<smem>>
      %54 = arith.index_cast %53 : i32 to index
      %c0_15 = arith.constant 0 : index
      %55 = vector.load %arg2[%54, %c0_15] : memref<128x64xf32, #tpu.memory_space<vmem>>, vector<1x64xf32>
      %56 = arith.maximumf %50, %55 : vector<1x64xf32>
      %c7_i32 = arith.constant 7 : i32
      %57 = arith.addi %16, %c7_i32 : i32
      %58 = arith.index_cast %57 : i32 to index
      %59 = memref.load %arg1[%58] : memref<1024xi32, #tpu.memory_space<smem>>
      %60 = arith.index_cast %59 : i32 to index
      %c0_16 = arith.constant 0 : index
      %61 = vector.load %arg2[%60, %c0_16] : memref<128x64xf32, #tpu.memory_space<vmem>>, vector<1x64xf32>
      %62 = arith.maximumf %56, %61 : vector<1x64xf32>
      %63 = arith.index_cast %arg6 : i32 to index
      %c0_17 = arith.constant 0 : index
      %64 = vector.load %arg5[%63, %c0_17] : memref<64x64xf32, #tpu.memory_space<vmem>>, vector<1x64xf32>
      tpu.vector_store %arg5[%63, %c0_17], %62 {strides = array<i32>} : memref<64x64xf32, #tpu.memory_space<vmem>>, vector<1x64xf32>,
    }
    %c64_i32_0 = arith.constant 64 : i32
    %c64_i32_1 = arith.constant 64 : i32
    %2 = arith.muli %arg0, %c64_i32_1 : i32
    %3 = tpu.assume_multiple %2, 8 : i32
    %4 = arith.index_cast %3 : i32 to index
    %c0 = arith.constant 0 : index
    %5 = vector.load %arg2[%4, %c0] : memref<128x64xf32, #tpu.memory_space<vmem>>, vector<64x64xf32>
    %6 = vector.extract_strided_slice %5 {offsets = [0, 0], sizes = [64, 32], strides = [1, 1]} : vector<64x64xf32> to vector<64x32xf32>
    %c0_2 = arith.constant 0 : index
    %c0_3 = arith.constant 0 : index
    %7 = vector.load %arg5[%c0_2, %c0_3] : memref<64x64xf32, #tpu.memory_space<vmem>>, vector<64x64xf32>
    %8 = vector.extract_strided_slice %7 {offsets = [0, 32], sizes = [64, 32], strides = [1, 1]} : vector<64x64xf32> to vector<64x32xf32>
    %c0_4 = arith.constant 0 : index
    %c0_5 = arith.constant 0 : index
    %9 = vector.load %arg3[%c0_4, %c0_5] : memref<64x32xf32, #tpu.memory_space<vmem>>, vector<64x32xf32>
    %10 = arith.addf %6, %8 : vector<64x32xf32>
    %cst = arith.constant 0.000000e+00 : f32
    %11 = vector.broadcast %cst : f32 to vector<64x32xf32>
    %12 = arith.maximumf %10, %11 : vector<64x32xf32>
    %13 = arith.addf %9, %12 : vector<64x32xf32>
    %c0_6 = arith.constant 0 : index
    %c0_7 = arith.constant 0 : index
    %14 = vector.load %arg4[%c0_6, %c0_7] : memref<64x32xf32, #tpu.memory_space<vmem>>, vector<64x32xf32>
    tpu.vector_store %arg4[%c0_6, %c0_7], %13 {strides = array<i32>} : memref<64x32xf32, #tpu.memory_space<vmem>>, vector<64x32xf32>,
    return
  }
  func.func @transform_0(%arg0: i32, %arg1: memref<1024xi32, #tpu.memory_space<smem>>) -> (i32, i32) {
    %c0_i32 = arith.constant 0 : i32
    %c0_i32_0 = arith.constant 0 : i32
    %c0_i32_1 = arith.constant 0 : i32
    return %c0_i32, %c0_i32_0 : i32, i32
  }
  func.func @transform_1(%arg0: i32, %arg1: memref<1024xi32, #tpu.memory_space<smem>>) -> (i32, i32) {
    %c0_i32 = arith.constant 0 : i32
    %c0_i32_0 = arith.constant 0 : i32
    return %arg0, %c0_i32 : i32, i32
  }
  func.func @transform_2(%arg0: i32, %arg1: memref<1024xi32, #tpu.memory_space<smem>>) -> (i32, i32) {
    %c0_i32 = arith.constant 0 : i32
    %c0_i32_0 = arith.constant 0 : i32
    return %arg0, %c0_i32 : i32, i32
  }
}

</mosaic_0001>

<llo_original>
// kernel: res_gcn_block_forward.2
$region0: #{res_gcn_block_forward.2}
  #allocation0 [shape = 'u32[]', space=smem, size = 0x4, offset = 0x4, fixed_abs, tag = 'smem constant byte address 0x4 - core index']
  #allocation1 [shape = 'u32[72,128]{1,0:T(1,128)}', space=vmem, size = 0x9000, scoped, tag = 'internal scratch']
  %s0 = inlined_call_operand.vmem [shape: f32[128,32], index: 0, kind: input, shape index: {}]
  %s1 = inlined_call_operand.vmem [shape: f32[32,64], index: 1, kind: input, shape index: {}]
  %s2 = inlined_call_operand.vmem [shape: f32[1,64], index: 2, kind: input, shape index: {}]
  %s3 = inlined_call_operand.vmem [shape: f32[128,64], index: 3, kind: output, shape index: {}]
  %s4 = sld [smem:[#allocation0]]
  $region45: #{res_gcn_block_forward.2} parent=0
    _
  %s6 = ssub.s32 1, %s4
  %s7 = scalar_select 0, %s6, %s4
  loop: start=0, step=1, limit=4
  $region2: #{res_gcn_block_forward.2} parent=0 // loop_pre_header
    _
  $region3: #{res_gcn_block_forward.2} parent=0 // loop_header
    %s9 = sphi 0, %s13
    %p10 = scmp.ge.s32.totalorder %s9, 4
    %s19 = sphi 0, %s21
    %s22 = sphi 0, %s19
    %s23 = sphi 0, %s22
    %s39 = sphi 0, %s23
    %s43 = sphi 0, %s43
    %s45 = sphi 0, %s43
    %s46 = sphi 0, %s45
    %s60 = sphi 0, %s46
    %s64 = sphi 0, %s64
    %s66 = sphi 0, %s64
    %s67 = sphi 0, %s66
    %s81 = sphi 0, %s67
    %s87 = sphi 0, %s89
    %s90 = sphi 0, %s87
    %s91 = sphi 0, %s90
    %s107 = sphi 0, %s91
  $region4: #{res_gcn_block_forward.2} parent=0 // loop_header_branch
    %12 = sbr.rel (%p10) target = $region8
  $region5: #{res_gcn_block_forward.2} parent=0 // loop_body
    %s14 = ssub.s32 %s9, 1
    %s15 = ssub.s32 %s9, 2
    %s16 = sadd.s32 %s9, 1
    %s17 = ssub.s32 %s9, %s16
    %p18 = scmp.eq.s32.totalorder %s17, 0
    %s20 = sadd.s32 %s19, 1
    %s21 = scalar_select %p18, %s19, %s20
    %p24 = pneg %p18
    %p25 = scmp.eq.s32.totalorder %s9, 1
    %p26 = por %p24, %p25
    %p27 = scmp.ne.s32.totalorder %s19, %s22
    %p28 = scmp.eq.s32.totalorder %s9, 0
    %p29 = por %p27, %p28
    %p30 = scmp.ne.s32.totalorder %s19, %s22
    %p31 = scmp.eq.s32.totalorder %s14, 1
    %p32 = por %p30, %p31
    %p33 = scmp.ne.s32.totalorder %s22, %s23
    %p34 = scmp.eq.s32.totalorder %s14, 0
    %p35 = por %p33, %p34
    %p36 = scmp.ne.s32.totalorder %s22, %s23
    %p37 = scmp.eq.s32.totalorder %s15, 1
    %p38 = por %p36, %p37
    %p40 = scmp.ne.s32.totalorder %s23, %s39
    %p41 = scmp.eq.s32.totalorder %s15, 0
    %p42 = por %p40, %p41
    %s44 = sadd.s32 %s43, 1
    %p47 = scmp.eq.s32.totalorder %s9, 1
    %p48 = scmp.ne.s32.totalorder %s43, %s45
    %p49 = scmp.eq.s32.totalorder %s9, 0
    %p50 = por %p48, %p49
    %p51 = scmp.ne.s32.totalorder %s43, %s45
    %p52 = scmp.eq.s32.totalorder %s14, 1
    %p53 = por %p51, %p52
    %p54 = scmp.ne.s32.totalorder %s45, %s46
    %p55 = scmp.eq.s32.totalorder %s14, 0
    %p56 = por %p54, %p55
    %p57 = scmp.ne.s32.totalorder %s45, %s46
    %p58 = scmp.eq.s32.totalorder %s15, 1
    %p59 = por %p57, %p58
    %p61 = scmp.ne.s32.totalorder %s46, %s60
    %p62 = scmp.eq.s32.totalorder %s15, 0
    %p63 = por %p61, %p62
    %s65 = sadd.s32 %s64, 1
    %p68 = scmp.eq.s32.totalorder %s9, 1
    %p69 = scmp.ne.s32.totalorder %s64, %s66
    %p70 = scmp.eq.s32.totalorder %s9, 0
    %p71 = por %p69, %p70
    %p72 = scmp.ne.s32.totalorder %s64, %s66
    %p73 = scmp.eq.s32.totalorder %s14, 1
    %p74 = por %p72, %p73
    %p75 = scmp.ne.s32.totalorder %s66, %s67
    %p76 = scmp.eq.s32.totalorder %s14, 0
    %p77 = por %p75, %p76
    %p78 = scmp.ne.s32.totalorder %s66, %s67
    %p79 = scmp.eq.s32.totalorder %s15, 1
    %p80 = por %p78, %p79
    %p82 = scmp.ne.s32.totalorder %s67, %s81
    %p83 = scmp.eq.s32.totalorder %s15, 0
    %p84 = por %p82, %p83
    %s85 = ssub.s32 %s9, %s16
    %p86 = scmp.eq.s32.totalorder %s85, 0
    %s88 = sadd.s32 %s87, 1
    %s89 = scalar_select %p86, %s87, %s88
    %p92 = pneg %p86
    %p93 = scmp.eq.s32.totalorder %s9, 1
    %p94 = por %p92, %p93
    %p95 = scmp.ne.s32.totalorder %s87, %s90
    %p96 = scmp.eq.s32.totalorder %s9, 0
    %p97 = por %p95, %p96
    %p98 = scmp.ne.s32.totalorder %s87, %s90
    %p99 = scmp.eq.s32.totalorder %s14, 1
    %p100 = por %p98, %p99
    %p101 = scmp.ne.s32.totalorder %s90, %s91
    %p102 = scmp.eq.s32.totalorder %s14, 0
    %p103 = por %p101, %p102
    %p104 = scmp.ne.s32.totalorder %s90, %s91
    %p105 = scmp.eq.s32.totalorder %s15, 1
    %p106 = por %p104, %p105
    %p108 = scmp.ne.s32.totalorder %s91, %s107
    %p109 = scmp.eq.s32.totalorder %s15, 0
    %p110 = por %p108, %p109
    %p111 = scmp.le.s32.totalorder 1, %s9
    %p112 = scmp.lt.s32.totalorder %s9, 3
    %p113 = pnand %p111, %p112
    %p114 = pneg %p113
    // Predicated region
    $region9: #{res_gcn_block_forward.2} parent=5 // pred_check
      _
    $region10: #{res_gcn_block_forward.2} parent=5 // pred_check_branch
      %116 = sbr.rel (%p113) target = $region12
    $region11: #{res_gcn_block_forward.2} parent=5 // pred_region
      %s117 = ssub.s32 %s9, 1
      // Predicated region
      $region13: #{res_gcn_block_forward.2} parent=11 // pred_check
        %p118 = pneg %p56
      $region14: #{res_gcn_block_forward.2} parent=11 // pred_check_branch
        %120 = sbr.rel (%p118) target = $region16
      $region15: #{res_gcn_block_forward.2} parent=11 // pred_region
        _
      $region16: #{res_gcn_block_forward.2} parent=11 // pred_fallthru
        _
      // Predicated region
      $region17: #{res_gcn_block_forward.2} parent=11 // pred_check
        %p121 = pneg %p77
      $region18: #{res_gcn_block_forward.2} parent=11 // pred_check_branch
        %123 = sbr.rel (%p121) target = $region20
      $region19: #{res_gcn_block_forward.2} parent=11 // pred_region
        _
      $region20: #{res_gcn_block_forward.2} parent=11 // pred_fallthru
        _
    $region12: #{res_gcn_block_forward.2} parent=5 // pred_fallthru
      _
    %p124 = scmp.lt.s32.totalorder %s9, 2
    // Predicated region
    $region21: #{res_gcn_block_forward.2} parent=5 // pred_check
      %p125 = pneg %p124
    $region22: #{res_gcn_block_forward.2} parent=5 // pred_check_branch
      %127 = sbr.rel (%p125) target = $region24
    $region23: #{res_gcn_block_forward.2} parent=5 // pred_region
      // Predicated region
      $region25: #{res_gcn_block_forward.2} parent=23 // pred_check
        %p128 = pneg %p29
      $region26: #{res_gcn_block_forward.2} parent=23 // pred_check_branch
        %130 = sbr.rel (%p128) target = $region28
      $region27: #{res_gcn_block_forward.2} parent=23 // pred_region
        %s131 = smul.u32 8, %s9
        %p132 = scmp.lt.s32.totalorder %s131, 15
        %s133 = scalar_select %p132, %s131, 15
        %s134 = smul.addr %s133, 8
        %s135 = scalar_lea.vmem %s0, %s134
        %s136 = smul.u32 8, %s9
      $region28: #{res_gcn_block_forward.2} parent=23 // pred_fallthru
        _
    $region24: #{res_gcn_block_forward.2} parent=5 // pred_fallthru
      _
    %p137 = scmp.le.s32.totalorder 1, %s9
    %p138 = scmp.lt.s32.totalorder %s9, 3
    %p139 = pnand %p137, %p138
    %p140 = pneg %p139
    // Predicated region
    $region29: #{res_gcn_block_forward.2} parent=5 // pred_check
      _
    $region30: #{res_gcn_block_forward.2} parent=5 // pred_check_branch
      %142 = sbr.rel (%p139) target = $region32
    $region31: #{res_gcn_block_forward.2} parent=5 // pred_region
      %s143 = ssub.s32 %s9, 1
      %s144 = smul.u32 8, %s14
      %p145 = scmp.lt.s32.totalorder %s144, 15
      %s146 = scalar_select %p145, %s144, 15
      %s147 = smul.addr %s146, 8
      %s148 = scalar_lea.vmem %s0, %s147
      %p149 = pneg %p35
      %p150 = pneg %p32
      %p151 = pneg %p56
      %p152 = pneg %p53
      %p153 = pneg %p77
      %p154 = pneg %p74
      %p155 = pneg %p103
      %p156 = pneg %p100
      %s157 = smul.u32 8, %s14
      %p158 = scmp.lt.s32.totalorder %s157, 15
      %s159 = scalar_select %p158, %s157, 15
      %s160 = smul.addr %s159, 8
      %s161 = scalar_lea.vmem %s3, %s160
      %s162 = smul.u32 8, %s14
      %p163 = scmp.lt.s32.totalorder %s162, 15
      %s164 = scalar_select %p163, %s162, 15
      %s165 = smul.addr %s164, 8
      %s166 = scalar_lea.vmem %s0, %s165
      %s167 = smul.u32 8, %s14
      %s168 = smul.u32 8, %s14
      %p169 = scmp.lt.s32.totalorder %s168, 15
      %s170 = scalar_select %p169, %s168, 15
      %s171 = smul.addr %s170, 8
      %s172 = scalar_lea.vmem %s3, %s171
      %s173 = smul.u32 8, %s14
      %v174 = vld [vmem:[%s166] sm:$0xff]
      %v175 = vld [vmem:[%s166 + $0x8] sm:$0xff]
      %v176 = vld [vmem:[%s166 + $0x10] sm:$0xff]
      %v177 = vld [vmem:[%s166 + $0x18] sm:$0xff]
      %v178 = vld [vmem:[%s166 + $0x20] sm:$0xff]
      %v179 = vld [vmem:[%s166 + $0x28] sm:$0xff]
      %v180 = vld [vmem:[%s166 + $0x30] sm:$0xff]
      %v181 = vld [vmem:[%s166 + $0x38] sm:$0xff]
      %v182 = vld [vmem:[%s1] sm:$0xff]
      %v183 = vld [vmem:[%s1 + $0x8] sm:$0xff]
      %v184 = vld [vmem:[%s1 + $0x10] sm:$0xff]
      %v185 = vld [vmem:[%s1 + $0x18] sm:$0xff]
      %v186 = vld [vmem:[%s2] sm:$0x1]
      %v188 = vperm.slane %v186, 0
      %vm190 = vcmask 261120
      %v192 = vsel %vm190, %v174, 0
      %v195 = vsel %vm190, %v175, 0
      %v198 = vsel %vm190, %v176, 0
      %v201 = vsel %vm190, %v177, 0
      %v204 = vsel %vm190, %v178, 0
      %v207 = vsel %vm190, %v179, 0
      %v210 = vsel %vm190, %v180, 0
      %v213 = vsel %vm190, %v181, 0
      %215 = vmatpush.msra.mxu0 0.0
      %216 = vmatpush.msra.mxu0 0.0
      %217 = vmatpush.msra.mxu0 0.0
      %218 = vmatpush.msra.mxu0 0.0
      %219 = vmatpush.msra.mxu0 0.0
      %220 = vmatpush.msra.mxu0 0.0
      %221 = vmatpush.msra.mxu0 0.0
      %222 = vmatpush.msra.mxu0 0.0
      %223 = vmatpush.msra.mxu0 0.0
      %224 = vmatpush.msra.mxu0 0.0
      %225 = vmatpush.msra.mxu0 0.0
      %226 = vmatpush.msra.mxu0 0.0
      %227 = vmatpush.msra.mxu0 %v185
      %228 = vmatpush.msra.mxu0 %v184
      %229 = vmatpush.msra.mxu0 %v183
      %230 = vmatpush.msra.mxu0 %v182
      %231 = vmatmul.f32.gmra.mxu0 %v192
      %v232 = vpop.f32.mrf.mxu0
      %v233 = vadd.f32 %v188, %v232
      %234 = vmatmul.f32.gmra.mxu0 %v195
      %v235 = vpop.f32.mrf.mxu0
      %v236 = vadd.f32 %v188, %v235
      %237 = vmatmul.f32.gmra.mxu0 %v198
      %v238 = vpop.f32.mrf.mxu0
      %v239 = vadd.f32 %v188, %v238
      %240 = vmatmul.f32.gmra.mxu0 %v201
      %v241 = vpop.f32.mrf.mxu0
      %v242 = vadd.f32 %v188, %v241
      %243 = vmatmul.f32.gmra.mxu0 %v204
      %v244 = vpop.f32.mrf.mxu0
      %v245 = vadd.f32 %v188, %v244
      %246 = vmatmul.f32.gmra.mxu0 %v207
      %v247 = vpop.f32.mrf.mxu0
      %v248 = vadd.f32 %v188, %v247
      %249 = vmatmul.f32.gmra.mxu0 %v210
      %v250 = vpop.f32.mrf.mxu0
      %v251 = vadd.f32 %v188, %v250
      %252 = vmatmul.f32.gmra.mxu0 %v213
      %v253 = vpop.f32.mrf.mxu0
      %v254 = vadd.f32 %v188, %v253
      %255 = vdwg.mxu0
      %vm256 = vcmask 523264
      %257 = vst.msk [vmem:[%s172] sm:$0xff] %vm256, %v233
      %258 = vst.msk [vmem:[%s172 + $0x8] sm:$0xff] %vm256, %v236
      %259 = vst.msk [vmem:[%s172 + $0x10] sm:$0xff] %vm256, %v239
      %260 = vst.msk [vmem:[%s172 + $0x18] sm:$0xff] %vm256, %v242
      %261 = vst.msk [vmem:[%s172 + $0x20] sm:$0xff] %vm256, %v245
      %262 = vst.msk [vmem:[%s172 + $0x28] sm:$0xff] %vm256, %v248
      %263 = vst.msk [vmem:[%s172 + $0x30] sm:$0xff] %vm256, %v251
      %264 = vst.msk [vmem:[%s172 + $0x38] sm:$0xff] %vm256, %v254
      %s265 = smul.u32 8, %s14
      %p266 = scmp.lt.s32.totalorder %s265, 15
      %s267 = scalar_select %p266, %s265, 15
      %s268 = smul.addr %s267, 8
      %s269 = scalar_lea.vmem %s3, %s268
      // Predicated region
      $region33: #{res_gcn_block_forward.2} parent=31 // pred_check
        %p270 = pneg %p100
      $region34: #{res_gcn_block_forward.2} parent=31 // pred_check_branch
        %272 = sbr.rel (%p270) target = $region36
      $region35: #{res_gcn_block_forward.2} parent=31 // pred_region
        %s273 = smul.u32 8, %s14
      $region36: #{res_gcn_block_forward.2} parent=31 // pred_fallthru
        _
    $region32: #{res_gcn_block_forward.2} parent=5 // pred_fallthru
      _
    %p274 = scmp.le.s32.totalorder 2, %s9
    // Predicated region
    $region37: #{res_gcn_block_forward.2} parent=5 // pred_check
      %p275 = pneg %p274
    $region38: #{res_gcn_block_forward.2} parent=5 // pred_check_branch
      %277 = sbr.rel (%p275) target = $region40
    $region39: #{res_gcn_block_forward.2} parent=5 // pred_region
      %s278 = ssub.s32 %s9, 2
      // Predicated region
      $region41: #{res_gcn_block_forward.2} parent=39 // pred_check
        %p279 = pneg %p106
      $region42: #{res_gcn_block_forward.2} parent=39 // pred_check_branch
        %281 = sbr.rel (%p279) target = $region44
      $region43: #{res_gcn_block_forward.2} parent=39 // pred_region
        %s282 = smul.u32 8, %s15
        %p283 = scmp.lt.s32.totalorder %s282, 15
        %s284 = scalar_select %p283, %s282, 15
        %s285 = smul.addr %s284, 8
        %s286 = scalar_lea.vmem %s3, %s285
      $region44: #{res_gcn_block_forward.2} parent=39 // pred_fallthru
        _
    $region40: #{res_gcn_block_forward.2} parent=5 // pred_fallthru
      _
  $region6: #{res_gcn_block_forward.2} parent=0 // loop_footer
    %s13 = sadd.s32 1, %s9
  $region7: #{res_gcn_block_forward.2} parent=0 // loop_footer_branch
    %8 = sbr.rel target = $region3
  $region8: #{res_gcn_block_forward.2} parent=0 // loop_exit
    _

// kernel: res_gcn_block_forward.3
$region0: #{res_gcn_block_forward.3}
  #allocation0 [shape = 'u32[]', space=smem, size = 0x4, offset = 0x4, fixed_abs, tag = 'smem constant byte address 0x4 - core index']
  #allocation1 [shape = 'u32[72,128]{1,0:T(1,128)}', space=vmem, size = 0x9000, scoped, tag = 'internal scratch']
  #allocation2 [shape = 'f32[64,64]{1,0:T(8,128)}', space=vmem, size = 0x8000, scoped, tag = 'scratch operand']
  #allocation3 [shape = 's32[1]{0}', space=sflag, size = 0x4, scoped, tag = 'scoped memory for res_gcn_block_forward.3']
  #allocation4 [shape = 'u8[4096]{0}', space=smem, size = 0x1000, scoped, tag = 'prefetched SMEM operand 0']
  %s0 = inlined_call_operand.vmem [shape: s32[1024], index: 0, kind: input, shape index: {}]
  %s1 = inlined_call_operand.vmem [shape: f32[128,64], index: 1, kind: input, shape index: {}]
  %s2 = inlined_call_operand.vmem [shape: f32[128,32], index: 2, kind: input, shape index: {}]
  %s3 = inlined_call_operand.vmem [shape: f32[128,32], index: 3, kind: output, shape index: {}]
  %s4 = sld [smem:[#allocation0]]
  $region48: #{res_gcn_block_forward.3} parent=0
    _
  %s6 = ssub.s32 1, %s4
  %s7 = scalar_select 0, %s6, %s4
  %s9 = sshll.u32 %s0, 4
  %s10 = int_to_ptr.vmem [resolvable:$true] %s9
  %12 = dma.vmem_to_smem %s10, 128, [#allocation4], [#allocation3]
  %14 = dma.done [#allocation3], 128
  %15 = sfence
  loop: start=0, step=1, limit=4
  $region2: #{res_gcn_block_forward.3} parent=0 // loop_pre_header
    _
  $region3: #{res_gcn_block_forward.3} parent=0 // loop_header
    %s17 = sphi 0, %s21
    %p18 = scmp.ge.s32.totalorder %s17, 4
    %s25 = sphi 0, %s25
    %s27 = sphi 0, %s25
    %s28 = sphi 0, %s27
    %s42 = sphi 0, %s28
    %s48 = sphi 0, %s50
    %s51 = sphi 0, %s48
    %s52 = sphi 0, %s51
    %s68 = sphi 0, %s52
    %s74 = sphi 0, %s76
    %s77 = sphi 0, %s74
    %s78 = sphi 0, %s77
    %s94 = sphi 0, %s78
  $region4: #{res_gcn_block_forward.3} parent=0 // loop_header_branch
    %20 = sbr.rel (%p18) target = $region8
  $region5: #{res_gcn_block_forward.3} parent=0 // loop_body
    %s22 = ssub.s32 %s17, 1
    %s23 = ssub.s32 %s17, 2
    %s24 = sadd.s32 %s17, 1
    %s26 = sadd.s32 %s25, 1
    %p29 = scmp.eq.s32.totalorder %s17, 1
    %p30 = scmp.ne.s32.totalorder %s25, %s27
    %p31 = scmp.eq.s32.totalorder %s17, 0
    %p32 = por %p30, %p31
    %p33 = scmp.ne.s32.totalorder %s25, %s27
    %p34 = scmp.eq.s32.totalorder %s22, 1
    %p35 = por %p33, %p34
    %p36 = scmp.ne.s32.totalorder %s27, %s28
    %p37 = scmp.eq.s32.totalorder %s22, 0
    %p38 = por %p36, %p37
    %p39 = scmp.ne.s32.totalorder %s27, %s28
    %p40 = scmp.eq.s32.totalorder %s23, 1
    %p41 = por %p39, %p40
    %p43 = scmp.ne.s32.totalorder %s28, %s42
    %p44 = scmp.eq.s32.totalorder %s23, 0
    %p45 = por %p43, %p44
    %s46 = ssub.s32 %s17, %s24
    %p47 = scmp.eq.s32.totalorder %s46, 0
    %s49 = sadd.s32 %s48, 1
    %s50 = scalar_select %p47, %s48, %s49
    %p53 = pneg %p47
    %p54 = scmp.eq.s32.totalorder %s17, 1
    %p55 = por %p53, %p54
    %p56 = scmp.ne.s32.totalorder %s48, %s51
    %p57 = scmp.eq.s32.totalorder %s17, 0
    %p58 = por %p56, %p57
    %p59 = scmp.ne.s32.totalorder %s48, %s51
    %p60 = scmp.eq.s32.totalorder %s22, 1
    %p61 = por %p59, %p60
    %p62 = scmp.ne.s32.totalorder %s51, %s52
    %p63 = scmp.eq.s32.totalorder %s22, 0
    %p64 = por %p62, %p63
    %p65 = scmp.ne.s32.totalorder %s51, %s52
    %p66 = scmp.eq.s32.totalorder %s23, 1
    %p67 = por %p65, %p66
    %p69 = scmp.ne.s32.totalorder %s52, %s68
    %p70 = scmp.eq.s32.totalorder %s23, 0
    %p71 = por %p69, %p70
    %s72 = ssub.s32 %s17, %s24
    %p73 = scmp.eq.s32.totalorder %s72, 0
    %s75 = sadd.s32 %s74, 1
    %s76 = scalar_select %p73, %s74, %s75
    %p79 = pneg %p73
    %p80 = scmp.eq.s32.totalorder %s17, 1
    %p81 = por %p79, %p80
    %p82 = scmp.ne.s32.totalorder %s74, %s77
    %p83 = scmp.eq.s32.totalorder %s17, 0
    %p84 = por %p82, %p83
    %p85 = scmp.ne.s32.totalorder %s74, %s77
    %p86 = scmp.eq.s32.totalorder %s22, 1
    %p87 = por %p85, %p86
    %p88 = scmp.ne.s32.totalorder %s77, %s78
    %p89 = scmp.eq.s32.totalorder %s22, 0
    %p90 = por %p88, %p89
    %p91 = scmp.ne.s32.totalorder %s77, %s78
    %p92 = scmp.eq.s32.totalorder %s23, 1
    %p93 = por %p91, %p92
    %p95 = scmp.ne.s32.totalorder %s78, %s94
    %p96 = scmp.eq.s32.totalorder %s23, 0
    %p97 = por %p95, %p96
    %p98 = scmp.le.s32.totalorder 1, %s17
    %p99 = scmp.lt.s32.totalorder %s17, 3
    %p100 = pnand %p98, %p99
    %p101 = pneg %p100
    // Predicated region
    $region9: #{res_gcn_block_forward.3} parent=5 // pred_check
      _
    $region10: #{res_gcn_block_forward.3} parent=5 // pred_check_branch
      %103 = sbr.rel (%p100) target = $region12
    $region11: #{res_gcn_block_forward.3} parent=5 // pred_region
      %s104 = ssub.s32 %s17, 1
      // Predicated region
      $region13: #{res_gcn_block_forward.3} parent=11 // pred_check
        %p105 = pneg %p38
      $region14: #{res_gcn_block_forward.3} parent=11 // pred_check_branch
        %107 = sbr.rel (%p105) target = $region16
      $region15: #{res_gcn_block_forward.3} parent=11 // pred_region
        _
      $region16: #{res_gcn_block_forward.3} parent=11 // pred_fallthru
        _
    $region12: #{res_gcn_block_forward.3} parent=5 // pred_fallthru
      _
    %p108 = scmp.lt.s32.totalorder %s17, 2
    // Predicated region
    $region17: #{res_gcn_block_forward.3} parent=5 // pred_check
      %p109 = pneg %p108
    $region18: #{res_gcn_block_forward.3} parent=5 // pred_check_branch
      %111 = sbr.rel (%p109) target = $region20
    $region19: #{res_gcn_block_forward.3} parent=5 // pred_region
      // Predicated region
      $region21: #{res_gcn_block_forward.3} parent=19 // pred_check
        %p112 = pneg %p58
      $region22: #{res_gcn_block_forward.3} parent=19 // pred_check_branch
        %114 = sbr.rel (%p112) target = $region24
      $region23: #{res_gcn_block_forward.3} parent=19 // pred_region
        %s115 = smul.u32 8, %s17
        %p116 = scmp.lt.s32.totalorder %s115, 15
        %s117 = scalar_select %p116, %s115, 15
        %s118 = smul.addr %s117, 8
        %s119 = scalar_lea.vmem %s2, %s118
        %s120 = smul.u32 8, %s17
      $region24: #{res_gcn_block_forward.3} parent=19 // pred_fallthru
        _
    $region20: #{res_gcn_block_forward.3} parent=5 // pred_fallthru
      _
    %p121 = scmp.le.s32.totalorder 1, %s17
    %p122 = scmp.lt.s32.totalorder %s17, 3
    %p123 = pnand %p121, %p122
    %p124 = pneg %p123
    // Predicated region
    $region25: #{res_gcn_block_forward.3} parent=5 // pred_check
      _
    $region26: #{res_gcn_block_forward.3} parent=5 // pred_check_branch
      %126 = sbr.rel (%p123) target = $region28
    $region27: #{res_gcn_block_forward.3} parent=5 // pred_region
      %s127 = ssub.s32 %s17, 1
      %p128 = pneg %p38
      %p129 = pneg %p35
      %s130 = smul.u32 8, %s22
      %p131 = scmp.lt.s32.totalorder %s130, 15
      %s132 = scalar_select %p131, %s130, 15
      %s133 = smul.addr %s132, 8
      %s134 = scalar_lea.vmem %s2, %s133
      %p135 = pneg %p64
      %p136 = pneg %p61
      %p137 = pneg %p90
      %p138 = pneg %p87
      %s139 = smul.u32 8, %s22
      %p140 = scmp.lt.s32.totalorder %s139, 15
      %s141 = scalar_select %p140, %s139, 15
      %s142 = smul.addr %s141, 8
      %s143 = scalar_lea.vmem %s3, %s142
      %s144 = smul.u32 8, %s22
      %p145 = scmp.lt.s32.totalorder %s144, 15
      %s146 = scalar_select %p145, %s144, 15
      %s147 = smul.addr %s146, 8
      %s148 = scalar_lea.vmem %s2, %s147
      %s149 = smul.u32 8, %s22
      %s150 = smul.u32 8, %s22
      %p151 = scmp.lt.s32.totalorder %s150, 15
      %s152 = scalar_select %p151, %s150, 15
      %s153 = smul.addr %s152, 8
      %s154 = scalar_lea.vmem %s3, %s153
      %s155 = smul.u32 8, %s22
      %s156 = smul.u32 %s22, 512
      loop: start=0, step=1, limit=64
      $region29: #{res_gcn_block_forward.3} parent=27 // loop_pre_header
        _
      $region30: #{res_gcn_block_forward.3} parent=27 // loop_header
        %s158 = sphi 0, %s162
        %p159 = scmp.ge.s32.totalorder %s158, 64
      $region31: #{res_gcn_block_forward.3} parent=27 // loop_header_branch
        %161 = sbr.rel (%p159) target = $region35
      $region32: #{res_gcn_block_forward.3} parent=27 // loop_body
        %s163 = smul.u32 %s158, 8
        %s164 = sadd.s32 %s156, %s163
        %s165 = sld [smem:[#allocation4 + %s164]]
        %s166 = scalar_lea.vmem %s1, %s165
        %v167 = vld [vmem:[%s166] sm:$0x1]
        %s168 = sadd.s32 %s164, 1
        %s169 = sld [smem:[#allocation4 + %s168]]
        %s170 = scalar_lea.vmem %s1, %s169
        %v171 = vld [vmem:[%s170] sm:$0x1]
        %v172 = vmax.f32 %v167, %v171
        %s173 = sadd.s32 %s164, 2
        %s174 = sld [smem:[#allocation4 + %s173]]
        %s175 = scalar_lea.vmem %s1, %s174
        %v176 = vld [vmem:[%s175] sm:$0x1]
        %v177 = vmax.f32 %v172, %v176
        %s178 = sadd.s32 %s164, 3
        %s179 = sld [smem:[#allocation4 + %s178]]
        %s180 = scalar_lea.vmem %s1, %s179
        %v181 = vld [vmem:[%s180] sm:$0x1]
        %v182 = vmax.f32 %v177, %v181
        %s183 = sadd.s32 %s164, 4
        %s184 = sld [smem:[#allocation4 + %s183]]
        %s185 = scalar_lea.vmem %s1, %s184
        %v186 = vld [vmem:[%s185] sm:$0x1]
        %v187 = vmax.f32 %v182, %v186
        %s188 = sadd.s32 %s164, 5
        %s189 = sld [smem:[#allocation4 + %s188]]
        %s190 = scalar_lea.vmem %s1, %s189
        %v191 = vld [vmem:[%s190] sm:$0x1]
        %v192 = vmax.f32 %v187, %v191
        %s193 = sadd.s32 %s164, 6
        %s194 = sld [smem:[#allocation4 + %s193]]
        %s195 = scalar_lea.vmem %s1, %s194
        %v196 = vld [vmem:[%s195] sm:$0x1]
        %v197 = vmax.f32 %v192, %v196
        %s198 = sadd.s32 %s164, 7
        %s199 = sld [smem:[#allocation4 + %s198]]
        %s200 = scalar_lea.vmem %s1, %s199
        %v201 = vld [vmem:[%s200] sm:$0x1]
        %v202 = vmax.f32 %v197, %v201
        %s203 = scalar_lea.vmem [#allocation2], %s158
        %vm204 = vcmask 516096
        %205 = vst.msk [vmem:[%s203] sm:$0x1] %vm204, %v202
      $region33: #{res_gcn_block_forward.3} parent=27 // loop_footer
        %s162 = sadd.s32 1, %s158
      $region34: #{res_gcn_block_forward.3} parent=27 // loop_footer_branch
        %157 = sbr.rel target = $region30
      $region35: #{res_gcn_block_forward.3} parent=27 // loop_exit
        _
      %s206 = smul.u32 %s22, 64
      %s207 = scalar_lea.vmem %s1, %s206
      %v208 = vld [vmem:[%s207] sm:$0xff]
      %v209 = vld [vmem:[%s207 + $0x8] sm:$0xff]
      %v210 = vld [vmem:[%s207 + $0x10] sm:$0xff]
      %v211 = vld [vmem:[%s207 + $0x18] sm:$0xff]
      %v212 = vld [vmem:[%s207 + $0x20] sm:$0xff]
      %v213 = vld [vmem:[%s207 + $0x28] sm:$0xff]
      %v214 = vld [vmem:[%s207 + $0x30] sm:$0xff]
      %v215 = vld [vmem:[%s207 + $0x38] sm:$0xff]
      %v216 = vld [vmem:[#allocation2] sm:$0xff]
      %v217 = vld [vmem:[#allocation2 + $0x8] sm:$0xff]
      %v218 = vld [vmem:[#allocation2 + $0x10] sm:$0xff]
      %v219 = vld [vmem:[#allocation2 + $0x18] sm:$0xff]
      %v220 = vld [vmem:[#allocation2 + $0x20] sm:$0xff]
      %v221 = vld [vmem:[#allocation2 + $0x28] sm:$0xff]
      %v222 = vld [vmem:[#allocation2 + $0x30] sm:$0xff]
      %v223 = vld [vmem:[#allocation2 + $0x38] sm:$0xff]
      %v224 = vld [vmem:[%s148] sm:$0xff]
      %v225 = vld [vmem:[%s148 + $0x8] sm:$0xff]
      %v226 = vld [vmem:[%s148 + $0x10] sm:$0xff]
      %v227 = vld [vmem:[%s148 + $0x18] sm:$0xff]
      %v228 = vld [vmem:[%s148 + $0x20] sm:$0xff]
      %v229 = vld [vmem:[%s148 + $0x28] sm:$0xff]
      %v230 = vld [vmem:[%s148 + $0x30] sm:$0xff]
      %v231 = vld [vmem:[%s148 + $0x38] sm:$0xff]
      %240 = vrot.lane.b32.xlu0 %v216, 96
      %v241 = vpop.permute.xlu0 %240
      %242 = vrot.lane.b32.xlu0 %v217, 96
      %v243 = vpop.permute.xlu0 %242
      %244 = vrot.lane.b32.xlu0 %v218, 96
      %v245 = vpop.permute.xlu0 %244
      %246 = vrot.lane.b32.xlu0 %v219, 96
      %v247 = vpop.permute.xlu0 %246
      %248 = vrot.lane.b32.xlu0 %v220, 96
      %v249 = vpop.permute.xlu0 %248
      %250 = vrot.lane.b32.xlu0 %v221, 96
      %v251 = vpop.permute.xlu0 %250
      %252 = vrot.lane.b32.xlu0 %v222, 96
      %v253 = vpop.permute.xlu0 %252
      %254 = vrot.lane.b32.xlu0 %v223, 96
      %v255 = vpop.permute.xlu0 %254
      %v264 = vadd.f32 %v208, %v241
      %v265 = vadd.f32 %v209, %v243
      %v266 = vadd.f32 %v210, %v245
      %v267 = vadd.f32 %v211, %v247
      %v268 = vadd.f32 %v212, %v249
      %v269 = vadd.f32 %v213, %v251
      %v270 = vadd.f32 %v214, %v253
      %v271 = vadd.f32 %v215, %v255
      %v272 = vmax.f32 %v264, 0.0
      %v273 = vmax.f32 %v265, 0.0
      %v274 = vmax.f32 %v266, 0.0
      %v275 = vmax.f32 %v267, 0.0
      %v276 = vmax.f32 %v268, 0.0
      %v277 = vmax.f32 %v269, 0.0
      %v278 = vmax.f32 %v270, 0.0
      %v279 = vmax.f32 %v271, 0.0
      %v280 = vadd.f32 %v224, %v272
      %v281 = vadd.f32 %v225, %v273
      %v282 = vadd.f32 %v226, %v274
      %v283 = vadd.f32 %v227, %v275
      %v284 = vadd.f32 %v228, %v276
      %v285 = vadd.f32 %v229, %v277
      %v286 = vadd.f32 %v230, %v278
      %v287 = vadd.f32 %v231, %v279
      %vm288 = vcmask 261120
      %289 = vst.msk [vmem:[%s154] sm:$0xff] %vm288, %v280
      %290 = vst.msk [vmem:[%s154 + $0x8] sm:$0xff] %vm288, %v281
      %291 = vst.msk [vmem:[%s154 + $0x10] sm:$0xff] %vm288, %v282
      %292 = vst.msk [vmem:[%s154 + $0x18] sm:$0xff] %vm288, %v283
      %293 = vst.msk [vmem:[%s154 + $0x20] sm:$0xff] %vm288, %v284
      %294 = vst.msk [vmem:[%s154 + $0x28] sm:$0xff] %vm288, %v285
      %295 = vst.msk [vmem:[%s154 + $0x30] sm:$0xff] %vm288, %v286
      %296 = vst.msk [vmem:[%s154 + $0x38] sm:$0xff] %vm288, %v287
      %s297 = smul.u32 8, %s22
      %p298 = scmp.lt.s32.totalorder %s297, 15
      %s299 = scalar_select %p298, %s297, 15
      %s300 = smul.addr %s299, 8
      %s301 = scalar_lea.vmem %s3, %s300
      // Predicated region
      $region36: #{res_gcn_block_forward.3} parent=27 // pred_check
        %p302 = pneg %p87
      $region37: #{res_gcn_block_forward.3} parent=27 // pred_check_branch
        %304 = sbr.rel (%p302) target = $region39
      $region38: #{res_gcn_block_forward.3} parent=27 // pred_region
        %s305 = smul.u32 8, %s22
      $region39: #{res_gcn_block_forward.3} parent=27 // pred_fallthru
        _
    $region28: #{res_gcn_block_forward.3} parent=5 // pred_fallthru
      _
    %p306 = scmp.le.s32.totalorder 2, %s17
    // Predicated region
    $region40: #{res_gcn_block_forward.3} parent=5 // pred_check
      %p307 = pneg %p306
    $region41: #{res_gcn_block_forward.3} parent=5 // pred_check_branch
      %309 = sbr.rel (%p307) target = $region43
    $region42: #{res_gcn_block_forward.3} parent=5 // pred_region
      %s310 = ssub.s32 %s17, 2
      // Predicated region
      $region44: #{res_gcn_block_forward.3} parent=42 // pred_check
        %p311 = pneg %p93
      $region45: #{res_gcn_block_forward.3} parent=42 // pred_check_branch
        %313 = sbr.rel (%p311) target = $region47
      $region46: #{res_gcn_block_forward.3} parent=42 // pred_region
        %s314 = smul.u32 8, %s23
        %p315 = scmp.lt.s32.totalorder %s314, 15
        %s316 = scalar_select %p315, %s314, 15
        %s317 = smul.addr %s316, 8
        %s318 = scalar_lea.vmem %s3, %s317
      $region47: #{res_gcn_block_forward.3} parent=42 // pred_fallthru
        _
    $region43: #{res_gcn_block_forward.3} parent=5 // pred_fallthru
      _
  $region6: #{res_gcn_block_forward.3} parent=0 // loop_footer
    %s21 = sadd.s32 1, %s17
  $region7: #{res_gcn_block_forward.3} parent=0 // loop_footer_branch
    %16 = sbr.rel target = $region3
  $region8: #{res_gcn_block_forward.3} parent=0 // loop_exit
    _

</llo_original>
